<compile_context>
chip_gen: v7x
topology: tpu7x:2x2x1
jax: 0.10.0
libtpu: 0.0.40
codegen_flags: <defaults>
</compile_context>

<pallas_src>
import jax
import jax.numpy as jnp
from jax.experimental import pallas as pl
from jax.experimental.pallas import tpu as pltpu

# torch.qint8 with reduce_range=True  ->  quant range [-64, 63]
QMIN = -64.0
QMAX = 63.0
# torch.finfo(torch.float32).eps — MinMaxObserver clamps scale to this
EPS = 1.1920928955078125e-07
LANE = 128
MAX_ROW_TILE = 2048   # packed rows per grid step (keeps VMEM footprint ~6 MiB)


def _round_up(v, m):
    return (v + m - 1) // m * m


def _next_pow2(v):
    return 1 << (int(v) - 1).bit_length()


def _pick_row_tile(n_rows):
    """Tile over packed rows: multiple of 8 sublanes, capped for VMEM headroom,
    and (when rows allow) >= 2 grid steps so both v7x TensorCores get work."""
    if n_rows < 16:
        return n_rows                               # single short full-extent tile
    half = _round_up((n_rows + 1) // 2, 8)
    return min(MAX_ROW_TILE, half)


def _minmax_qparams(t):
    """torch.quantization.MinMaxObserver: per_tensor_affine, qint8, reduce_range."""
    t_min = jnp.minimum(jnp.min(t), 0.0)
    t_max = jnp.maximum(jnp.max(t), 0.0)
    scale = jnp.maximum((t_max - t_min) / (QMAX - QMIN), EPS)
    zp = jnp.clip(QMIN - jnp.round(t_min / scale), QMIN, QMAX)
    return scale.astype(jnp.float32), zp.astype(jnp.float32)


# ----------------------------- Pallas kernels --------------------------------

def _float_linear_kernel(x_ref, w_ref, b_ref, o_ref):
    # float forward (wrapper path before calibrate_and_quantize):
    # bf16 operands -> single-pass MXU, f32 accumulation, packed lane-dense store.
    o_ref[...] = (
        jnp.dot(x_ref[...].astype(jnp.bfloat16), w_ref[...],
                preferred_element_type=jnp.float32)
        + b_ref[...]
    )


def _dynquant_linear_kernel(x_ref, qw_ref, b_ref, params_ref, o_ref):
    # dynamic-quantized forward (after calibrate_and_quantize).
    # Operands are centered, so no zero-point correction terms are needed:
    #   q_x_c = clip(round(x/s_x + zp_x)) - zp_x   in [-127, 127]
    #   qw_ref holds (q_w - zp_w)                  in [-127, 127]
    #   y = (q_x_c @ q_w_c) * s_x * s_w + bias
    # Codes <= 127 are exact in bf16; per-row sums (K = 32, products <= 127^2)
    # are exact in the f32 MXU accumulator.
    inv_sx = params_ref[0]   # 1 / activation scale (precomputed reciprocal)
    zp_x = params_ref[1]     # activation zero point (integer-valued f32)
    dq = params_ref[2]       # scale_x * scale_w

    x = x_ref[...]                                                    # (tr, pack*K) f32
    q_x = jnp.clip(jnp.round(x * inv_sx + zp_x), QMIN, QMAX) - zp_x   # centered codes
    acc = jnp.dot(q_x.astype(jnp.bfloat16), qw_ref[...],
                  preferred_element_type=jnp.float32)                 # (tr, 128)
    o_ref[...] = acc * dq + b_ref[...]


# ------------------------------ pallas_call wrapper ----------------------------

def _call_linear(kernel, xr, w_blk, b_packed, smem_params=None):
    R, KP = xr.shape
    OP = w_blk.shape[1]
    tr = _pick_row_tile(R)
    grid = (pl.cdiv(R, tr),)   # ragged last tile handled by Pallas block clipping

    in_specs = [
        pl.BlockSpec((tr, KP), lambda i: (i, 0)),   # packed-row batch tile
        pl.BlockSpec((KP, OP), lambda i: (0, 0)),   # block-diagonal weight (resident)
        pl.BlockSpec((1, OP), lambda i: (0, 0)),    # packed bias
    ]
    args = [xr, w_blk, b_packed]
    if smem_params is not None:
        in_specs.append(pl.BlockSpec(memory_space=pltpu.MemorySpace.SMEM))
        args.append(smem_params)

    return pl.pallas_call(
        kernel,
        out_shape=jax.ShapeDtypeStruct((R, OP), jnp.float32),
        grid_spec=pltpu.PrefetchScalarGridSpec(
            num_scalar_prefetch=0,
            grid=grid,
            in_specs=in_specs,
            out_specs=pl.BlockSpec((tr, OP), lambda i: (i, 0)),
        ),
        compiler_params=pltpu.CompilerParams(
            dimension_semantics=("parallel",)),
    )(*args)


# --------------------------------- wrapper ------------------------------------

class DynamicQuantWrapperPallas:
    """JAX/Pallas equivalent of DynamicQuantWrapper(nn.Linear(IN, OUT), config).

    forward():
      - before calibrate_and_quantize(): float Linear (Pallas kernel, bf16 MXU)
      - after:  dynamic per-tensor-affine qint8 (reduce_range) Linear
    """

    def __init__(self, weight, bias):
        # weight follows the PyTorch nn.Linear convention: (out_features, in_features)
        self.weight = jnp.asarray(weight, jnp.float32)
        self.bias = jnp.asarray(bias, jnp.float32)
        self.out_features, self.in_features = self.weight.shape

        # Output packing: `pack` batch rows share one lane-dense output row.
        if self.out_features <= LANE:
            self.out_slot = _next_pow2(self.out_features)
            self.pack = LANE // self.out_slot
        else:
            self.out_slot = _round_up(self.out_features, LANE)
            self.pack = 1
        self.out_packed = self.pack * self.out_slot

        # exactness guard for the bf16 integer-code matmul in the quant kernel
        assert (QMAX - QMIN) <= 254 and self.in_features * (127.0 ** 2) < 2 ** 24

        # packed bias: bias tiled once per packed batch row
        b_pad = jnp.pad(self.bias, (0, self.out_slot - self.out_features))
        self.bias_packed = jnp.tile(b_pad, self.pack).reshape(1, self.out_packed)

        # float-path weight: block-diagonal (pack*K, out_packed), bf16 MXU operand
        self.w_float_blk = self._block_diag(self.weight.T).astype(jnp.bfloat16)

        self._quantized = False
        # TODO(synk): torch.quantization.prepare/convert graph rewriting,
        # DataLoader-driven calibration and get_size_stats have no Pallas
        # equivalent; weight qparams are computed directly from the weights.

    def _block_diag(self, w_t):
        # w_t: (K, out_features).  Returns (pack*K, pack*out_slot) with
        # block[i*K + k, i*out_slot + c] = w_t[k, c] (zeros elsewhere), so
        # (x reshaped to (B/pack, pack*K)) @ block emits the packed output
        # layout directly from the MXU — no in-kernel relayout, no padded lanes.
        w_pad = jnp.pad(w_t, ((0, 0), (0, self.out_slot - self.out_features)))
        eye = jnp.eye(self.pack, dtype=w_t.dtype)
        blk = jnp.einsum('ij,kc->ikjc', eye, w_pad)     # (pack, K, pack, out_slot)
        return blk.reshape(self.pack * self.in_features, self.out_packed)

    def _pack_rows(self, x):
        # (B, K) -> (ceil(B/pack), pack*K); a free row-major view when B % pack == 0.
        batch = x.shape[0]
        b_pad = _round_up(batch, self.pack)
        if b_pad != batch:
            x = jnp.pad(x, ((0, b_pad - batch), (0, 0)))
        return x.reshape(b_pad // self.pack, self.pack * self.in_features), batch

    def _unpack_rows(self, y_packed, batch):
        # (R, pack*out_slot) -> (B, out_features); free reshape (+ slice only if padded)
        y = y_packed.reshape(-1, self.out_slot)
        return y[:batch, :self.out_features]

    def calibrate_and_quantize(self):
        # Weight MinMaxObserver: per_tensor_affine, qint8, reduce_range=True.
        w_scale, w_zp = _minmax_qparams(self.weight)
        q_w = jnp.clip(jnp.round(self.weight / w_scale + w_zp), QMIN, QMAX)
        # Centered (q_w - zp_w) in [-127, 127]: exact in bf16, and it removes
        # the zero-point correction terms from the kernel entirely.
        qw_centered_t = (q_w - w_zp).T                   # (K, out_features)
        self.q_w_blk = self._block_diag(qw_centered_t).astype(jnp.bfloat16)
        self.w_scale = w_scale
        self._quantized = True

    def _quant_forward(self, x):
        # Dynamic per-tensor activation observer: a tiny global XLA reduce
        # feeding the kernel via SMEM scalars, so batch tiling in the kernel
        # keeps PyTorch's per-tensor quantization numerics.
        # TODO(synk): for VMEM-resident batches this observer could be fused
        # into the kernel to avoid the second HBM pass over x.
        x_scale, zp_x = _minmax_qparams(x)
        params = jnp.stack([
            1.0 / x_scale,            # reciprocal of activation scale
            zp_x,                     # activation zero point
            x_scale * self.w_scale,   # dequant scale
        ]).astype(jnp.float32)
        xr, batch = self._pack_rows(x)
        y = _call_linear(_dynquant_linear_kernel, xr, self.q_w_blk,
                         self.bias_packed, smem_params=params)
        return self._unpack_rows(y, batch)

    def __call__(self, x):
        if self._quantized:
            return self._quant_forward(x)
        xr, batch = self._pack_rows(x)
        y = _call_linear(_float_linear_kernel, xr, self.w_float_blk,
                         self.bias_packed)
        return self._unpack_rows(y, batch)


# ---------------------------------- main ---------------------------------------

if __name__ == "__main__":
    BATCH, IN_FEATURES, OUT_FEATURES = 8, 32, 16

    key = jax.random.PRNGKey(0)
    k_x, k_w, k_b = jax.random.split(key, 3)

    x = jax.random.normal(k_x, (BATCH, IN_FEATURES), dtype=jnp.float32)
    # deterministic "nn.Linear(32, 16)" parameters
    bound = 1.0 / (IN_FEATURES ** 0.5)
    weight = jax.random.uniform(k_w, (OUT_FEATURES, IN_FEATURES),
                                minval=-bound, maxval=bound, dtype=jnp.float32)
    bias = jax.random.uniform(k_b, (OUT_FEATURES,),
                              minval=-bound, maxval=bound, dtype=jnp.float32)

    wrapper = DynamicQuantWrapperPallas(weight, bias)

    # Path 1: no quantized model yet -> float forward
    y_float = jax.block_until_ready(wrapper(x))

    # Path 2: calibrate_and_quantize -> dynamic-quantized forward
    wrapper.calibrate_and_quantize()
    y_quant = jax.block_until_ready(wrapper(x))

    y_ref = x @ weight.T + bias
    assert y_float.shape == (BATCH, OUT_FEATURES)
    assert y_quant.shape == (BATCH, OUT_FEATURES)
    # float path uses bf16 MXU operands -> loose-but-tight-enough tolerance
    assert jnp.max(jnp.abs(y_float - y_ref)) < 5e-2
    # int8 dynamic-quantization error bound
    assert jnp.max(jnp.abs(y_quant - y_ref)) < 0.25

    print("KERNEL_OK")
</pallas_src>

<mosaic_0001>
module attributes {stable_mosaic.version = 11 : i64} {
  func.func @_float_linear_kernel(%arg0: i32, %arg1: memref<1x256xf32, #tpu.memory_space<vmem>>, %arg2: memref<256x128xbf16, #tpu.memory_space<vmem>>, %arg3: memref<1x128xf32, #tpu.memory_space<vmem>>, %arg4: memref<1x128xf32, #tpu.memory_space<vmem>>) attributes {dimension_semantics = [#tpu.dimension_semantics<parallel>], iteration_bounds = array<i64: 1>, scalar_prefetch = 0 : i64, scratch_operands = 0 : i64, tpu.core_type = #tpu.core_type<tc>, window_params = [{transform_indices = @transform_0, window_bounds = array<i64: 1, 256>}, {pipeline_mode = #tpu.pipeline_mode<synchronous>, transform_indices = @transform_1, window_bounds = array<i64: 256, 128>}, {pipeline_mode = #tpu.pipeline_mode<synchronous>, transform_indices = @transform_2, window_bounds = array<i64: 1, 128>}, {transform_indices = @transform_3, window_bounds = array<i64: 1, 128>}]} {
    %c0 = arith.constant 0 : index
    %c0_0 = arith.constant 0 : index
    %0 = vector.load %arg1[%c0, %c0_0] : memref<1x256xf32, #tpu.memory_space<vmem>>, vector<1x256xf32>
    %1 = arith.truncf %0 : vector<1x256xf32> to vector<1x256xbf16>
    %c0_1 = arith.constant 0 : index
    %c0_2 = arith.constant 0 : index
    %2 = vector.load %arg2[%c0_1, %c0_2] : memref<256x128xbf16, #tpu.memory_space<vmem>>, vector<256x128xbf16>
    %cst = arith.constant dense<0.000000e+00> : vector<1x128xf32>
    %3 = tpu.matmul %1, %2, %cst {dimension_numbers = #tpu.dot_dimension_numbers<[1], [0], [0], [1], [0, 0, 1, 1], [], []>} : vector<1x256xbf16>, vector<256x128xbf16>, vector<1x128xf32> -> vector<1x128xf32>
    %c0_3 = arith.constant 0 : index
    %c0_4 = arith.constant 0 : index
    %4 = vector.load %arg3[%c0_3, %c0_4] : memref<1x128xf32, #tpu.memory_space<vmem>>, vector<1x128xf32>
    %5 = arith.addf %3, %4 : vector<1x128xf32>
    %c0_5 = arith.constant 0 : index
    %c0_6 = arith.constant 0 : index
    %6 = vector.load %arg4[%c0_5, %c0_6] : memref<1x128xf32, #tpu.memory_space<vmem>>, vector<1x128xf32>
    tpu.vector_store %arg4[%c0_5, %c0_6], %5 {strides = array<i32>} : memref<1x128xf32, #tpu.memory_space<vmem>>, vector<1x128xf32>,
    return
  }
  func.func @transform_0(%arg0: i32) -> (i32, i32) {
    %c0_i32 = arith.constant 0 : i32
    %c0_i32_0 = arith.constant 0 : i32
    return %arg0, %c0_i32 : i32, i32
  }
  func.func @transform_1(%arg0: i32) -> (i32, i32) {
    %c0_i32 = arith.constant 0 : i32
    %c0_i32_0 = arith.constant 0 : i32
    %c0_i32_1 = arith.constant 0 : i32
    return %c0_i32, %c0_i32_0 : i32, i32
  }
  func.func @transform_2(%arg0: i32) -> (i32, i32) {
    %c0_i32 = arith.constant 0 : i32
    %c0_i32_0 = arith.constant 0 : i32
    %c0_i32_1 = arith.constant 0 : i32
    return %c0_i32, %c0_i32_0 : i32, i32
  }
  func.func @transform_3(%arg0: i32) -> (i32, i32) {
    %c0_i32 = arith.constant 0 : i32
    %c0_i32_0 = arith.constant 0 : i32
    return %arg0, %c0_i32 : i32, i32
  }
}

</mosaic_0001>

<llo_original>
// kernel: tpu_custom_call.1
$region0: #{tpu_custom_call.1}
  #allocation0 [shape = 'u32[]', space=smem, size = 0x4, offset = 0x4, fixed_abs, tag = 'smem constant byte address 0x4 - core index']
  #allocation1 [shape = 'u32[144,128]{1,0:T(1,128)}', space=vmem, size = 0x12000, scoped, tag = 'internal scratch']
  %s0 = inlined_call_operand.hbm [shape: f32[1,256], index: 0, kind: input, shape index: {}]
  %s1 = inlined_call_operand.hbm [shape: bf16[256,128], index: 1, kind: input, shape index: {}]
  %s2 = inlined_call_operand.vmem [shape: f32[1,128], index: 2, kind: input, shape index: {}]
  %s3 = inlined_call_operand.hbm [shape: f32[1,128], index: 3, kind: output, shape index: {}]
  %s4 = sld [smem:[#allocation0]]
  $region30: #{tpu_custom_call.1} parent=0
    _
  %s6 = ssub.s32 1, %s4
  %s7 = scalar_select 0, %s6, %s4
  $region1: #{tpu_custom_call.1} parent=0
    #allocation2 [shape = 'u8[1024]{0}', space=vmem, size = 0x400, scoped, tag = 'input window, operand 0, single buffered']
    #allocation3 [shape = 's32[1]{0}', space=sflag, size = 0x4, scoped, tag = 'scoped memory for tpu_custom_call.1']
    #allocation4 [shape = 's32[1]{0}', space=sflag, size = 0x4, scoped, tag = 'scoped memory for tpu_custom_call.1']
    #allocation5 [shape = 'u8[65536]{0}', space=vmem, size = 0x10000, scoped, tag = 'input window, operand 1, single buffered']
    #allocation6 [shape = 's32[1]{0}', space=sflag, size = 0x4, scoped, tag = 'scoped memory for tpu_custom_call.1']
    #allocation7 [shape = 'u8[512]{0}', space=vmem, size = 0x400, scoped, tag = 'output window, operand 0, single buffered']
    %8 = vsyncpa [#allocation3], 0
    %9 = vsyncpa [#allocation6], 0
    %10 = vsyncpa [#allocation4], 0
    // Predicated region
    $region2: #{tpu_custom_call.1} parent=1 // pred_check
      _
    $region3: #{tpu_custom_call.1} parent=1 // pred_check_branch
      %12 = sbr.rel (0) target = $region5
    $region4: #{tpu_custom_call.1} parent=1 // pred_region
      %s14 = ssub.s32 32, 32
      %15 = vsyncadd [#allocation3], %s14
      %s17 = sshll.u32 [#allocation2], 4
      %s18 = int_to_ptr.vmem [resolvable:$true] %s17
      %20 = dma.hbm_to_vmem [thread:$0]  %s0, 32, %s18, [#allocation3]
    $region5: #{tpu_custom_call.1} parent=1 // pred_fallthru
      _
    // Predicated region
    $region6: #{tpu_custom_call.1} parent=1 // pred_check
      _
    $region7: #{tpu_custom_call.1} parent=1 // pred_check_branch
      %22 = sbr.rel (0) target = $region9
    $region8: #{tpu_custom_call.1} parent=1 // pred_region
      %s24 = ssub.s32 2048, 2048
      %25 = vsyncadd [#allocation6], %s24
      %s26 = sshll.u32 [#allocation5], 4
      %s27 = int_to_ptr.vmem [resolvable:$true] %s26
      %32 = dma.hbm_to_vmem [thread:$0]  %s1, 2048, %s27, [#allocation6], 64, 64, 4
    $region9: #{tpu_custom_call.1} parent=1 // pred_fallthru
      _
    // Predicated region
    $region10: #{tpu_custom_call.1} parent=1 // pred_check
      _
    $region11: #{tpu_custom_call.1} parent=1 // pred_check_branch
      %34 = sbr.rel (0) target = $region13
    $region12: #{tpu_custom_call.1} parent=1 // pred_region
      _
    $region13: #{tpu_custom_call.1} parent=1 // pred_fallthru
      _
    // Predicated region
    $region14: #{tpu_custom_call.1} parent=1 // pred_check
      _
    $region15: #{tpu_custom_call.1} parent=1 // pred_check_branch
      %36 = sbr.rel (0) target = $region17
    $region16: #{tpu_custom_call.1} parent=1 // pred_region
      %37 = dma.done [#allocation3], 32
    $region17: #{tpu_custom_call.1} parent=1 // pred_fallthru
      _
    // Predicated region
    $region18: #{tpu_custom_call.1} parent=1 // pred_check
      _
    $region19: #{tpu_custom_call.1} parent=1 // pred_check_branch
      %39 = sbr.rel (0) target = $region21
    $region20: #{tpu_custom_call.1} parent=1 // pred_region
      %40 = dma.done [#allocation6], 2048
    $region21: #{tpu_custom_call.1} parent=1 // pred_fallthru
      _
    %v42 = vld [vmem:[#allocation2] sm:$0x3]
    %v44 = vlaneseq
    %v45 = vshrl.u32 %v44, 7
    %v46 = vsub.s32 0, %v45
    %v47 = vrot.slane %v42, %v46
    %v48 = vlaneseq
    %v49 = vshrl.u32 %v48, 7
    %v50 = vsub.s32 1, %v49
    %v51 = vrot.slane %v42, %v50
    %v54 = vpack.c.bf16 %v47, %v47
    %v55 = vpack.c.bf16 %v51, %v51
    %v56 = vld [vmem:[#allocation5] sm:$0xf]
    %v57 = vld [vmem:[#allocation5 + $0x4] sm:$0xf]
    %v58 = vld [vmem:[#allocation5 + $0x8] sm:$0xf]
    %v59 = vld [vmem:[#allocation5 + $0xc] sm:$0xf]
    %v60 = vld [vmem:[#allocation5 + $0x10] sm:$0xf]
    %v61 = vld [vmem:[#allocation5 + $0x14] sm:$0xf]
    %v62 = vld [vmem:[#allocation5 + $0x18] sm:$0xf]
    %v63 = vld [vmem:[#allocation5 + $0x1c] sm:$0xf]
    %v64 = vld [vmem:[#allocation5 + $0x20] sm:$0xf]
    %v65 = vld [vmem:[#allocation5 + $0x24] sm:$0xf]
    %v66 = vld [vmem:[#allocation5 + $0x28] sm:$0xf]
    %v67 = vld [vmem:[#allocation5 + $0x2c] sm:$0xf]
    %v68 = vld [vmem:[#allocation5 + $0x30] sm:$0xf]
    %v69 = vld [vmem:[#allocation5 + $0x34] sm:$0xf]
    %v70 = vld [vmem:[#allocation5 + $0x38] sm:$0xf]
    %v71 = vld [vmem:[#allocation5 + $0x3c] sm:$0xf]
    %v72 = vld [vmem:[#allocation5 + $0x40] sm:$0xf]
    %v73 = vld [vmem:[#allocation5 + $0x44] sm:$0xf]
    %v74 = vld [vmem:[#allocation5 + $0x48] sm:$0xf]
    %v75 = vld [vmem:[#allocation5 + $0x4c] sm:$0xf]
    %v76 = vld [vmem:[#allocation5 + $0x50] sm:$0xf]
    %v77 = vld [vmem:[#allocation5 + $0x54] sm:$0xf]
    %v78 = vld [vmem:[#allocation5 + $0x58] sm:$0xf]
    %v79 = vld [vmem:[#allocation5 + $0x5c] sm:$0xf]
    %v80 = vld [vmem:[#allocation5 + $0x60] sm:$0xf]
    %v81 = vld [vmem:[#allocation5 + $0x64] sm:$0xf]
    %v82 = vld [vmem:[#allocation5 + $0x68] sm:$0xf]
    %v83 = vld [vmem:[#allocation5 + $0x6c] sm:$0xf]
    %v84 = vld [vmem:[#allocation5 + $0x70] sm:$0xf]
    %v85 = vld [vmem:[#allocation5 + $0x74] sm:$0xf]
    %v86 = vld [vmem:[#allocation5 + $0x78] sm:$0xf]
    %v87 = vld [vmem:[#allocation5 + $0x7c] sm:$0xf]
    %v88 = vld [vmem:[%s2] sm:$0x1]
    %v121 = vunpack.c.l.b16 %v56
    %v122 = vunpack.c.l.b16 %v57
    %v123 = vunpack.c.l.b16 %v58
    %v124 = vunpack.c.l.b16 %v59
    %v125 = vunpack.c.l.b16 %v60
    %v126 = vunpack.c.l.b16 %v61
    %v127 = vunpack.c.l.b16 %v62
    %v128 = vunpack.c.l.b16 %v63
    %v129 = vunpack.c.l.b16 %v64
    %v130 = vunpack.c.l.b16 %v65
    %v131 = vunpack.c.l.b16 %v66
    %v132 = vunpack.c.l.b16 %v67
    %v133 = vunpack.c.l.b16 %v68
    %v134 = vunpack.c.l.b16 %v69
    %v135 = vunpack.c.l.b16 %v70
    %v136 = vunpack.c.l.b16 %v71
    %v137 = vunpack.c.l.b16 %v72
    %v138 = vunpack.c.l.b16 %v73
    %v139 = vunpack.c.l.b16 %v74
    %v140 = vunpack.c.l.b16 %v75
    %v141 = vunpack.c.l.b16 %v76
    %v142 = vunpack.c.l.b16 %v77
    %v143 = vunpack.c.l.b16 %v78
    %v144 = vunpack.c.l.b16 %v79
    %v145 = vunpack.c.l.b16 %v80
    %v146 = vunpack.c.l.b16 %v81
    %v147 = vunpack.c.l.b16 %v82
    %v148 = vunpack.c.l.b16 %v83
    %v149 = vunpack.c.l.b16 %v84
    %v150 = vunpack.c.l.b16 %v85
    %v151 = vunpack.c.l.b16 %v86
    %v152 = vunpack.c.l.b16 %v87
    %v153 = vpack.c.b16 %v122, %v121
    %v154 = vpack.c.b16 %v124, %v123
    %v155 = vpack.c.b16 %v126, %v125
    %v156 = vpack.c.b16 %v128, %v127
    %v157 = vpack.c.b16 %v130, %v129
    %v158 = vpack.c.b16 %v132, %v131
    %v159 = vpack.c.b16 %v134, %v133
    %v160 = vpack.c.b16 %v136, %v135
    %v161 = vpack.c.b16 %v138, %v137
    %v162 = vpack.c.b16 %v140, %v139
    %v163 = vpack.c.b16 %v142, %v141
    %v164 = vpack.c.b16 %v144, %v143
    %v165 = vpack.c.b16 %v146, %v145
    %v166 = vpack.c.b16 %v148, %v147
    %v167 = vpack.c.b16 %v150, %v149
    %v168 = vpack.c.b16 %v152, %v151
    %185 = vmatprep.subr.bf16.mxu0 0
    %186 = vmatpush1.bf16.msra.mxu0 %v153
    %187 = vmatprep.subr.bf16.mxu0 0
    %188 = vmatpush1.bf16.msra.mxu0 %v154
    %189 = vmatprep.subr.bf16.mxu0 0
    %190 = vmatpush1.bf16.msra.mxu0 %v155
    %191 = vmatprep.subr.bf16.mxu0 0
    %192 = vmatpush1.bf16.msra.mxu0 %v156
    %193 = vmatprep.subr.bf16.mxu0 0
    %194 = vmatpush1.bf16.msra.mxu0 %v157
    %195 = vmatprep.subr.bf16.mxu0 0
    %196 = vmatpush1.bf16.msra.mxu0 %v158
    %197 = vmatprep.subr.bf16.mxu0 0
    %198 = vmatpush1.bf16.msra.mxu0 %v159
    %199 = vmatprep.subr.bf16.mxu0 0
    %200 = vmatpush1.bf16.msra.mxu0 %v160
    %201 = vmatprep.subr.bf16.mxu0 0
    %202 = vmatpush1.bf16.msra.mxu0 %v161
    %203 = vmatprep.subr.bf16.mxu0 0
    %204 = vmatpush1.bf16.msra.mxu0 %v162
    %205 = vmatprep.subr.bf16.mxu0 0
    %206 = vmatpush1.bf16.msra.mxu0 %v163
    %207 = vmatprep.subr.bf16.mxu0 0
    %208 = vmatpush1.bf16.msra.mxu0 %v164
    %209 = vmatprep.subr.bf16.mxu0 0
    %210 = vmatpush1.bf16.msra.mxu0 %v165
    %211 = vmatprep.subr.bf16.mxu0 0
    %212 = vmatpush1.bf16.msra.mxu0 %v166
    %213 = vmatprep.subr.bf16.mxu0 0
    %214 = vmatpush1.bf16.msra.mxu0 %v167
    %215 = vmatprep.subr.bf16.mxu0 0
    %216 = vmatpush1.bf16.msra.mxu0 %v168
    %217 = vmatprep.mubr.bf16.mxu0 %v55
    %218 = vmatmul.mubr.bf16.gmra.mrb[0].mxu0 %v54
    %v219 = vpop.f32.mrb[0].mxu0
    %v220 = vadd.f32 %v88, %v219
    %v221 = vpop.f32.mrb[0].mxu0
    %v222 = vpop.f32.mrb[0].mxu0
    %v223 = vpop.f32.mrb[0].mxu0
    %224 = vdwg.mxu0
    %225 = vst [vmem:[#allocation7] sm:$0x1] %v220
    // Predicated region
    $region22: #{tpu_custom_call.1} parent=1 // pred_check
      _
    $region23: #{tpu_custom_call.1} parent=1 // pred_check_branch
      %227 = sbr.rel (0) target = $region25
    $region24: #{tpu_custom_call.1} parent=1 // pred_region
      %s229 = ssub.s32 16, 16
      %230 = vsyncadd [#allocation4], %s229
      %s232 = sshll.u32 [#allocation7], 4
      %s233 = int_to_ptr.vmem [resolvable:$true] %s232
      %235 = dma.vmem_to_hbm [thread:$0]  %s233, 16, %s3, [#allocation4]
    $region25: #{tpu_custom_call.1} parent=1 // pred_fallthru
      _
    // Predicated region
    $region26: #{tpu_custom_call.1} parent=1 // pred_check
      _
    $region27: #{tpu_custom_call.1} parent=1 // pred_check_branch
      %237 = sbr.rel (0) target = $region29
    $region28: #{tpu_custom_call.1} parent=1 // pred_region
      %238 = dma.done [#allocation4], 16
    $region29: #{tpu_custom_call.1} parent=1 // pred_fallthru
      _
    %239 = vsyncpa [#allocation3], 1
    %240 = vsyncpa [#allocation6], 1
    %241 = vsyncpa [#allocation4], 1

</llo_original>
